<compile_context>
chip_gen: v7x
topology: tpu7x:2x2x1
jax: 0.10.0
libtpu: 0.0.40
codegen_flags: <defaults>
</compile_context>

<pallas_src>
import jax
import jax.numpy as jnp
from jax.experimental import pallas as pl
from jax.experimental.pallas import tpu as pltpu

NEG_SLOPE = 0.01  # default negative_slope of F.leaky_relu
BF16 = jnp.bfloat16


def _leaky(x):
    return jnp.where(x > 0, x, NEG_SLOPE * x)


# --------------------------------------------------------------------------
# Kernel 1: fused input projection  x0[:, :F] = x_emb @ W_emb + b_emb
#                                   x0[:, F:2F] = x_user @ W_user + b_user
# (weights are pre-padded/fused to FP=128 lanes; matmuls in bf16, f32 accum)
# --------------------------------------------------------------------------
def input_proj_kernel(xe_ref, xu_ref, wp_ref, wu_ref, b_ref, o_ref):
    acc = jnp.dot(xe_ref[...], wp_ref[...], preferred_element_type=jnp.float32)
    acc = acc + jnp.dot(xu_ref[...], wu_ref[...],
                        preferred_element_type=jnp.float32)
    o_ref[...] = acc + b_ref[...]


def input_proj(x_emb, x_user, w_in_p, w_in_u, b_in, *, tm=None):
    N, E = x_emb.shape
    U = x_user.shape[1]
    FP = w_in_p.shape[1]
    if tm is None:
        tm = N if N <= 512 else 256
    assert N % tm == 0
    return pl.pallas_call(
        input_proj_kernel,
        out_shape=jax.ShapeDtypeStruct((N, FP), jnp.float32),
        grid=(N // tm,),
        in_specs=[pl.BlockSpec((tm, E), lambda i: (i, 0)),
                  pl.BlockSpec((tm, U), lambda i: (i, 0)),
                  pl.BlockSpec((E, FP), lambda i: (0, 0)),
                  pl.BlockSpec((U, FP), lambda i: (0, 0)),
                  pl.BlockSpec((1, FP), lambda i: (0, 0))],
        out_specs=pl.BlockSpec((tm, FP), lambda i: (i, 0)),
        compiler_params=pltpu.CompilerParams(
            dimension_semantics=("parallel",)),
    )(x_emb.astype(BF16), x_user.astype(BF16), w_in_p, w_in_u, b_in)


# --------------------------------------------------------------------------
# Kernel 2: fused dual GCN stack.
# grid = (L layers, N//tn row blocks); per layer:
#   xw  = (X @ Wcat)            (computed once per layer at r == 0, bf16)
#   y_r = A[l, rows, :] @ xw    (row-tiled)
#   X[rows] = leaky(y_r * scale + shift')      (bias folded into shift')
# Node state X lives in a persistent (N, FP) f32 VMEM scratch.
# --------------------------------------------------------------------------
def fused_gcn_kernel(x0_ref, a_ref, w_ref, scale_ref, shift_ref, o_ref,
                     x_state, xw):
    l = pl.program_id(0)
    r = pl.program_id(1)
    tn = o_ref.shape[0]

    @pl.when((l == 0) & (r == 0))
    def _():
        x_state[...] = x0_ref[...]

    @pl.when(r == 0)
    def _():
        xw[...] = jnp.dot(x_state[...].astype(BF16), w_ref[0],
                          preferred_element_type=jnp.float32).astype(BF16)

    y = jnp.dot(a_ref[0], xw[...], preferred_element_type=jnp.float32)
    y = y * scale_ref[0] + shift_ref[0]     # folded eval BN (+ folded GCN bias)
    y = _leaky(y)                           # dropout == identity (eval)

    row0 = pl.multiple_of(r * tn, tn)
    x_state[pl.ds(row0, tn), :] = y
    o_ref[...] = y


def fused_gcn(x0, a_bf16, w_cat, scale_cat, shift_cat, *, tn=None):
    L, N, _ = a_bf16.shape
    FP = x0.shape[1]
    if tn is None:
        tn = N if N <= 256 else 256
        while N % tn:
            tn -= 16
    assert N % tn == 0 and tn % 8 == 0
    return pl.pallas_call(
        fused_gcn_kernel,
        out_shape=jax.ShapeDtypeStruct((N, FP), jnp.float32),
        grid=(L, N // tn),
        in_specs=[pl.BlockSpec((N, FP), lambda l, r: (0, 0)),
                  pl.BlockSpec((1, tn, N), lambda l, r: (l, r, 0)),
                  pl.BlockSpec((1, FP, FP), lambda l, r: (l, 0, 0)),
                  pl.BlockSpec((1, 1, FP), lambda l, r: (l, 0, 0)),
                  pl.BlockSpec((1, 1, FP), lambda l, r: (l, 0, 0))],
        out_specs=pl.BlockSpec((tn, FP), lambda l, r: (r, 0)),
        scratch_shapes=[pltpu.VMEM((N, FP), jnp.float32),
                        pltpu.VMEM((N, FP), BF16)],
        compiler_params=pltpu.CompilerParams(
            dimension_semantics=("arbitrary", "arbitrary"),
            vmem_limit_bytes=32 * 1024 * 1024),
    )(x0, a_bf16, w_cat, scale_cat, shift_cat)


# --------------------------------------------------------------------------
# Kernel 3: head — per-graph mean pooling (pool matmul), bert_fc, fusion MLP,
# sigmoid. Batch-of-graphs side is tiny, single grid step, f32.
# --------------------------------------------------------------------------
def head_kernel(pool_ref, xcat_ref, bert_ref, wb_ref, bb_ref,
                w1c_ref, w1b_ref, b1_ref, w2_ref, b2_ref, o_ref):
    pooled = jnp.dot(pool_ref[...], xcat_ref[...],
                     preferred_element_type=jnp.float32)          # [B, FP]
    bert_enc = jnp.dot(bert_ref[...], wb_ref[...],
                       preferred_element_type=jnp.float32) + bb_ref[...]
    # cat([x_p, x_u, bert]) @ fc1_w  ==  pooled @ W1cat + bert_enc @ W1b
    h = (jnp.dot(pooled, w1c_ref[...], preferred_element_type=jnp.float32)
         + jnp.dot(bert_enc, w1b_ref[...], preferred_element_type=jnp.float32)
         + b1_ref[...])
    h = _leaky(h)
    logits = jnp.dot(h, w2_ref[...], preferred_element_type=jnp.float32) + b2_ref[...]
    o_ref[...] = 1.0 / (1.0 + jnp.exp(-logits))


def fusion_head(pool, x_cat, bert_pool, wb, bb, w1c, w1b, b1, w2, b2):
    B = pool.shape[0]
    C = w2.shape[1]
    args = (pool, x_cat, bert_pool, wb, bb, w1c, w1b, b1, w2, b2)
    in_specs = [pl.BlockSpec(a.shape, lambda i, nd=a.ndim: (0,) * nd)
                for a in args]
    return pl.pallas_call(
        head_kernel,
        out_shape=jax.ShapeDtypeStruct((B, C), jnp.float32),
        grid=(1,),
        in_specs=in_specs,
        out_specs=pl.BlockSpec((B, C), lambda i: (0, 0)),
    )(*args)


# ------------------------------- parameters --------------------------------
def build_params(key, *, vocab, emb_dim, n_feature, user_features,
                 bert_dim, n_hidden, n_class):
    ks = iter(jax.random.split(key, 40))
    p = {}
    s = 0.1
    p["emb_table"] = jax.random.normal(next(ks), (vocab, emb_dim), jnp.float32)
    p["fc_emb_w"] = s * jax.random.normal(next(ks), (emb_dim, n_feature), jnp.float32)
    p["fc_emb_b"] = s * jax.random.normal(next(ks), (n_feature,), jnp.float32)
    p["fc_user_w"] = s * jax.random.normal(next(ks), (user_features, n_feature), jnp.float32)
    p["fc_user_b"] = s * jax.random.normal(next(ks), (n_feature,), jnp.float32)
    p["bert_fc_w"] = s * jax.random.normal(next(ks), (bert_dim, n_feature), jnp.float32)
    p["bert_fc_b"] = s * jax.random.normal(next(ks), (n_feature,), jnp.float32)
    for stack in ("p", "u"):
        p[f"gcn_w_{stack}"] = s * jax.random.normal(next(ks), (n_hidden, n_feature, n_feature), jnp.float32)
        p[f"gcn_b_{stack}"] = s * jax.random.normal(next(ks), (n_hidden, 1, n_feature), jnp.float32)
        gamma = 1.0 + s * jax.random.normal(next(ks), (n_hidden, 1, n_feature), jnp.float32)
        beta = s * jax.random.normal(next(ks), (n_hidden, 1, n_feature), jnp.float32)
        rmean = s * jax.random.normal(next(ks), (n_hidden, 1, n_feature), jnp.float32)
        rvar = 1.0 + 0.1 * jax.random.uniform(next(ks), (n_hidden, 1, n_feature), jnp.float32)
        scale = gamma / jnp.sqrt(rvar + 1e-5)
        p[f"bn_scale_{stack}"] = scale
        p[f"bn_shift_{stack}"] = beta - rmean * scale
    p["fc1_w"] = s * jax.random.normal(next(ks), (3 * n_feature, n_feature), jnp.float32)
    p["fc1_b"] = s * jax.random.normal(next(ks), (n_feature,), jnp.float32)
    p["fc2_w"] = s * jax.random.normal(next(ks), (n_feature, n_class), jnp.float32)
    p["fc2_b"] = s * jax.random.normal(next(ks), (n_class,), jnp.float32)
    return p


def prepare_fused(p):
    """Build the fused / lane-padded / bf16 parameter set the kernels consume."""
    E, F = p["fc_emb_w"].shape
    U = p["fc_user_w"].shape[0]
    L = p["gcn_w_p"].shape[0]
    FP = max(128, ((2 * F + 127) // 128) * 128)    # fused, 128-lane padded width
    assert 2 * F <= FP

    f = {"FP": FP, "F": F}
    f["emb_table"] = p["emb_table"]

    # fused input projection (fc_embedding -> cols [:F], fc_user -> cols [F:2F])
    w_in_p = jnp.zeros((E, FP), jnp.float32).at[:, :F].set(p["fc_emb_w"])
    w_in_u = jnp.zeros((U, FP), jnp.float32).at[:, F:2 * F].set(p["fc_user_w"])
    b_in = (jnp.zeros((1, FP), jnp.float32)
            .at[0, :F].set(p["fc_emb_b"]).at[0, F:2 * F].set(p["fc_user_b"]))
    f["w_in_p"] = w_in_p.astype(BF16)
    f["w_in_u"] = w_in_u.astype(BF16)
    f["b_in"] = b_in

    # fused (block-diagonal) GCN weights; GCN bias folded into BN shift
    w_cat = (jnp.zeros((L, FP, FP), jnp.float32)
             .at[:, :F, :F].set(p["gcn_w_p"])
             .at[:, F:2 * F, F:2 * F].set(p["gcn_w_u"]))
    scale_cat = (jnp.zeros((L, 1, FP), jnp.float32)
                 .at[:, :, :F].set(p["bn_scale_p"])
                 .at[:, :, F:2 * F].set(p["bn_scale_u"]))
    shift_p = p["gcn_b_p"] * p["bn_scale_p"] + p["bn_shift_p"]
    shift_u = p["gcn_b_u"] * p["bn_scale_u"] + p["bn_shift_u"]
    shift_cat = (jnp.zeros((L, 1, FP), jnp.float32)
                 .at[:, :, :F].set(shift_p)
                 .at[:, :, F:2 * F].set(shift_u))
    f["gcn_w_cat"] = w_cat.astype(BF16)
    f["bn_scale_cat"] = scale_cat
    f["bn_shift_cat"] = shift_cat

    # head: fc1 split into the (padded) pooled part and the bert part
    w1cat = (jnp.zeros((FP, F), jnp.float32)
             .at[:F].set(p["fc1_w"][:F])
             .at[F:2 * F].set(p["fc1_w"][F:2 * F]))
    f["fc1_w_cat"] = w1cat
    f["fc1_w_bert"] = p["fc1_w"][2 * F:]
    f["fc1_b"] = p["fc1_b"].reshape(1, -1)
    f["bert_fc_w"] = p["bert_fc_w"]
    f["bert_fc_b"] = p["bert_fc_b"].reshape(1, -1)
    f["fc2_w"] = p["fc2_w"]
    f["fc2_b"] = p["fc2_b"].reshape(1, -1)
    return f


# ------------------------------- forward pass -------------------------------
def dual_dynamic_gcn_wotf(fp, node_idx, user_feats, bert_pool, a_stack,
                          batch, n_graphs, *, tn=None):
    # embedding lookup (host-side gather)
    # TODO(synk): fuse the gather + projection with PrefetchScalarGridSpec +
    # pl.Element row gather if N * emb_dim ever gets large.
    x_emb = jnp.take(fp["emb_table"], node_idx, axis=0)              # [N, E]

    # fused input projection -> padded [N, FP] node state
    x0 = input_proj(x_emb, user_feats, fp["w_in_p"], fp["w_in_u"], fp["b_in"])

    # fused dual GCN stack (single pass over the shared adjacencies, bf16)
    x_cat = fused_gcn(x0, a_stack.astype(BF16), fp["gcn_w_cat"],
                      fp["bn_scale_cat"], fp["bn_shift_cat"], tn=tn)

    # per-graph mean pooling matrix [B, N]  (Mean_nBatch)
    onehot = (batch[None, :] == jnp.arange(n_graphs)[:, None]).astype(jnp.float32)
    pool = onehot / jnp.maximum(onehot.sum(axis=1, keepdims=True), 1.0)

    # pooling + bert_fc + fusion MLP + sigmoid in one head kernel
    return fusion_head(pool, x_cat, bert_pool,
                       fp["bert_fc_w"], fp["bert_fc_b"],
                       fp["fc1_w_cat"], fp["fc1_w_bert"], fp["fc1_b"],
                       fp["fc2_w"], fp["fc2_b"])


# ------------------------------- references --------------------------------
def reference_mirrored(fp, node_idx, user_feats, bert_pool, a_stack, batch, n_graphs):
    """Pure-JAX reference mirroring the kernel's bf16/fused numerics."""
    x_emb = jnp.take(fp["emb_table"], node_idx, axis=0)
    x = (jnp.dot(x_emb.astype(BF16), fp["w_in_p"], preferred_element_type=jnp.float32)
         + jnp.dot(user_feats.astype(BF16), fp["w_in_u"], preferred_element_type=jnp.float32)
         + fp["b_in"])
    a16 = a_stack.astype(BF16)
    for l in range(a16.shape[0]):
        xw = jnp.dot(x.astype(BF16), fp["gcn_w_cat"][l],
                     preferred_element_type=jnp.float32).astype(BF16)
        y = jnp.dot(a16[l], xw, preferred_element_type=jnp.float32)
        y = y * fp["bn_scale_cat"][l] + fp["bn_shift_cat"][l]
        x = _leaky(y)
    onehot = (batch[None, :] == jnp.arange(n_graphs)[:, None]).astype(jnp.float32)
    pool = onehot / jnp.maximum(onehot.sum(axis=1, keepdims=True), 1.0)
    pooled = pool @ x
    bert_enc = bert_pool @ fp["bert_fc_w"] + fp["bert_fc_b"]
    h = _leaky(pooled @ fp["fc1_w_cat"] + bert_enc @ fp["fc1_w_bert"] + fp["fc1_b"])
    return jax.nn.sigmoid(h @ fp["fc2_w"] + fp["fc2_b"])


def reference_module_f32(params, node_idx, user_feats, bert_pool, a_stack, batch, n_graphs):
    """Pure f32 module-math reference (un-fused)."""
    x_emb = jnp.take(params["emb_table"], node_idx, axis=0)
    x_prop = x_emb @ params["fc_emb_w"] + params["fc_emb_b"]
    x_user = user_feats @ params["fc_user_w"] + params["fc_user_b"]
    bert_enc = bert_pool @ params["bert_fc_w"] + params["bert_fc_b"]
    for stack in ("p", "u"):
        x = x_prop if stack == "p" else x_user
        for l in range(a_stack.shape[0]):
            y = a_stack[l] @ (x @ params[f"gcn_w_{stack}"][l]) + params[f"gcn_b_{stack}"][l]
            y = y * params[f"bn_scale_{stack}"][l] + params[f"bn_shift_{stack}"][l]
            x = _leaky(y)
        if stack == "p":
            x_prop = x
        else:
            x_user = x
    onehot = (batch[None, :] == jnp.arange(n_graphs)[:, None]).astype(jnp.float32)
    pool = onehot / jnp.maximum(onehot.sum(axis=1, keepdims=True), 1.0)
    fused = jnp.concatenate([pool @ x_prop, pool @ x_user, bert_enc], axis=1)
    h = _leaky(fused @ params["fc1_w"] + params["fc1_b"])
    return jax.nn.sigmoid(h @ params["fc2_w"] + params["fc2_b"])


# ----------------------------------- main -----------------------------------
if __name__ == "__main__":
    # small, deterministic configuration
    B = 2                  # graphs in the batch
    nodes_per_graph = 16
    N = B * nodes_per_graph
    vocab = 20
    emb_dim = 24
    n_feature = 32
    user_features = 10
    bert_dim = 32
    n_hidden = 3           # the 3 dynamic adjacency snapshots used in forward
    n_class = 4

    key = jax.random.PRNGKey(0)
    kp, kidx, kuser, kbert, kadj = jax.random.split(key, 5)
    params = build_params(kp, vocab=vocab, emb_dim=emb_dim, n_feature=n_feature,
                          user_features=user_features, bert_dim=bert_dim,
                          n_hidden=n_hidden, n_class=n_class)
    fused_params = prepare_fused(params)

    node_idx = jax.random.randint(kidx, (N,), 0, vocab)                      # data.x
    user_feats = jax.random.normal(kuser, (N, user_features), jnp.float32)   # idx2user_dict
    bert_pool = jax.random.normal(kbert, (B, bert_dim), jnp.float32)         # BERT pooler_output (synthetic)
    batch = jnp.repeat(jnp.arange(B), nodes_per_graph)                       # data.batch

    # three dynamic dense adjacencies (edge_index / edge_values made dense)
    adj_keys = jax.random.split(kadj, n_hidden)
    a_list = []
    for l in range(n_hidden):
        k1, k2 = jax.random.split(adj_keys[l])
        mask = (jax.random.uniform(k1, (N, N)) < 0.3).astype(jnp.float32)
        block = (batch[:, None] == batch[None, :]).astype(jnp.float32)       # within-graph edges
        vals = jax.random.uniform(k2, (N, N), jnp.float32)
        a = mask * block * vals + jnp.eye(N, dtype=jnp.float32)              # self loops
        a = a / jnp.maximum(a.sum(axis=1, keepdims=True), 1e-6)              # row-normalize
        a_list.append(a)
    a_stack = jnp.stack(a_list, axis=0)                                      # [L, N, N]

    out = dual_dynamic_gcn_wotf(fused_params, node_idx, user_feats, bert_pool,
                                a_stack, batch, B, tn=16)
    out = jax.block_until_ready(out)
    assert out.shape == (B, n_class)

    ref_bf16 = reference_mirrored(fused_params, node_idx, user_feats, bert_pool,
                                  a_stack, batch, B)
    ref_f32 = reference_module_f32(params, node_idx, user_feats, bert_pool,
                                   a_stack, batch, B)
    assert jnp.allclose(out, ref_bf16, rtol=5e-3, atol=5e-3), \
        "mismatch vs bf16-mirrored reference"
    assert jnp.allclose(out, ref_f32, rtol=0, atol=5e-2), \
        "mismatch vs f32 module reference"
    print("KERNEL_OK")
</pallas_src>

<mosaic_0001>
module attributes {stable_mosaic.version = 11 : i64} {
  func.func @input_proj_kernel(%arg0: i32, %arg1: memref<32x24xbf16, #tpu.memory_space<vmem>>, %arg2: memref<32x10xbf16, #tpu.memory_space<vmem>>, %arg3: memref<24x128xbf16, #tpu.memory_space<vmem>>, %arg4: memref<10x128xbf16, #tpu.memory_space<vmem>>, %arg5: memref<1x128xf32, #tpu.memory_space<vmem>>, %arg6: memref<32x128xf32, #tpu.memory_space<vmem>>) attributes {dimension_semantics = [#tpu.dimension_semantics<parallel>], iteration_bounds = array<i64: 1>, scalar_prefetch = 0 : i64, scratch_operands = 0 : i64, tpu.core_type = #tpu.core_type<tc>, window_params = [{transform_indices = @transform_0, window_bounds = array<i64: 32, 24>}, {transform_indices = @transform_1, window_bounds = array<i64: 32, 10>}, {pipeline_mode = #tpu.pipeline_mode<synchronous>, transform_indices = @transform_2, window_bounds = array<i64: 24, 128>}, {pipeline_mode = #tpu.pipeline_mode<synchronous>, transform_indices = @transform_3, window_bounds = array<i64: 10, 128>}, {pipeline_mode = #tpu.pipeline_mode<synchronous>, transform_indices = @transform_4, window_bounds = array<i64: 1, 128>}, {transform_indices = @transform_5, window_bounds = array<i64: 32, 128>}]} {
    %c0 = arith.constant 0 : index
    %c0_0 = arith.constant 0 : index
    %0 = vector.load %arg1[%c0, %c0_0] : memref<32x24xbf16, #tpu.memory_space<vmem>>, vector<32x24xbf16>
    %c0_1 = arith.constant 0 : index
    %c0_2 = arith.constant 0 : index
    %1 = vector.load %arg3[%c0_1, %c0_2] : memref<24x128xbf16, #tpu.memory_space<vmem>>, vector<24x128xbf16>
    %cst = arith.constant dense<0.000000e+00> : vector<32x128xf32>
    %2 = tpu.matmul %0, %1, %cst {dimension_numbers = #tpu.dot_dimension_numbers<[1], [0], [0], [1], [0, 0, 1, 1], [], []>} : vector<32x24xbf16>, vector<24x128xbf16>, vector<32x128xf32> -> vector<32x128xf32>
    %c0_3 = arith.constant 0 : index
    %c0_4 = arith.constant 0 : index
    %3 = vector.load %arg2[%c0_3, %c0_4] : memref<32x10xbf16, #tpu.memory_space<vmem>>, vector<32x10xbf16>
    %c0_5 = arith.constant 0 : index
    %c0_6 = arith.constant 0 : index
    %4 = vector.load %arg4[%c0_5, %c0_6] : memref<10x128xbf16, #tpu.memory_space<vmem>>, vector<10x128xbf16>
    %cst_7 = arith.constant dense<0.000000e+00> : vector<32x128xf32>
    %5 = tpu.matmul %3, %4, %cst_7 {dimension_numbers = #tpu.dot_dimension_numbers<[1], [0], [0], [1], [0, 0, 1, 1], [], []>} : vector<32x10xbf16>, vector<10x128xbf16>, vector<32x128xf32> -> vector<32x128xf32>
    %6 = arith.addf %2, %5 : vector<32x128xf32>
    %c0_8 = arith.constant 0 : index
    %c0_9 = arith.constant 0 : index
    %7 = vector.load %arg5[%c0_8, %c0_9] : memref<1x128xf32, #tpu.memory_space<vmem>>, vector<1x128xf32>
    %8 = vector.broadcast %7 : vector<1x128xf32> to vector<32x128xf32>
    %9 = arith.addf %6, %8 : vector<32x128xf32>
    %c0_10 = arith.constant 0 : index
    %c0_11 = arith.constant 0 : index
    %10 = vector.load %arg6[%c0_10, %c0_11] : memref<32x128xf32, #tpu.memory_space<vmem>>, vector<32x128xf32>
    tpu.vector_store %arg6[%c0_10, %c0_11], %9 {strides = array<i32>} : memref<32x128xf32, #tpu.memory_space<vmem>>, vector<32x128xf32>,
    return
  }
  func.func @transform_0(%arg0: i32) -> (i32, i32) {
    %c0_i32 = arith.constant 0 : i32
    %c0_i32_0 = arith.constant 0 : i32
    return %arg0, %c0_i32 : i32, i32
  }
  func.func @transform_1(%arg0: i32) -> (i32, i32) {
    %c0_i32 = arith.constant 0 : i32
    %c0_i32_0 = arith.constant 0 : i32
    return %arg0, %c0_i32 : i32, i32
  }
  func.func @transform_2(%arg0: i32) -> (i32, i32) {
    %c0_i32 = arith.constant 0 : i32
    %c0_i32_0 = arith.constant 0 : i32
    %c0_i32_1 = arith.constant 0 : i32
    return %c0_i32, %c0_i32_0 : i32, i32
  }
  func.func @transform_3(%arg0: i32) -> (i32, i32) {
    %c0_i32 = arith.constant 0 : i32
    %c0_i32_0 = arith.constant 0 : i32
    %c0_i32_1 = arith.constant 0 : i32
    return %c0_i32, %c0_i32_0 : i32, i32
  }
  func.func @transform_4(%arg0: i32) -> (i32, i32) {
    %c0_i32 = arith.constant 0 : i32
    %c0_i32_0 = arith.constant 0 : i32
    %c0_i32_1 = arith.constant 0 : i32
    return %c0_i32, %c0_i32_0 : i32, i32
  }
  func.func @transform_5(%arg0: i32) -> (i32, i32) {
    %c0_i32 = arith.constant 0 : i32
    %c0_i32_0 = arith.constant 0 : i32
    return %arg0, %c0_i32 : i32, i32
  }
}

</mosaic_0001>

<llo_original>
// kernel: tpu_custom_call.1
$region0: #{tpu_custom_call.1}
  #allocation0 [shape = 'u32[]', space=smem, size = 0x4, offset = 0x4, fixed_abs, tag = 'smem constant byte address 0x4 - core index']
  #allocation1 [shape = 'u32[144,128]{1,0:T(1,128)}', space=vmem, size = 0x12000, scoped, tag = 'internal scratch']
  %s0 = inlined_call_operand.vmem [shape: bf16[32,24], index: 0, kind: input, shape index: {}]
  %s1 = inlined_call_operand.vmem [shape: bf16[32,10], index: 1, kind: input, shape index: {}]
  %s2 = inlined_call_operand.vmem [shape: bf16[24,128], index: 2, kind: input, shape index: {}]
  %s3 = inlined_call_operand.vmem [shape: bf16[10,128], index: 3, kind: input, shape index: {}]
  %s4 = inlined_call_operand.vmem [shape: f32[1,128], index: 4, kind: input, shape index: {}]
  %s5 = inlined_call_operand.hbm [shape: f32[32,128], index: 5, kind: output, shape index: {}]
  %s6 = sld [smem:[#allocation0]]
  $region30: #{tpu_custom_call.1} parent=0
    _
  %s8 = ssub.s32 1, %s6
  %s9 = scalar_select 0, %s8, %s6
  $region1: #{tpu_custom_call.1} parent=0
    #allocation2 [shape = 'u8[16384]{0}', space=vmem, size = 0x4000, scoped, tag = 'output window, operand 0, single buffered']
    #allocation3 [shape = 's32[1]{0}', space=sflag, size = 0x4, scoped, tag = 'scoped memory for tpu_custom_call.1']
    %10 = vsyncpa [#allocation3], 0
    // Predicated region
    $region2: #{tpu_custom_call.1} parent=1 // pred_check
      _
    $region3: #{tpu_custom_call.1} parent=1 // pred_check_branch
      %12 = sbr.rel (0) target = $region5
    $region4: #{tpu_custom_call.1} parent=1 // pred_region
      _
    $region5: #{tpu_custom_call.1} parent=1 // pred_fallthru
      _
    // Predicated region
    $region6: #{tpu_custom_call.1} parent=1 // pred_check
      _
    $region7: #{tpu_custom_call.1} parent=1 // pred_check_branch
      %14 = sbr.rel (0) target = $region9
    $region8: #{tpu_custom_call.1} parent=1 // pred_region
      _
    $region9: #{tpu_custom_call.1} parent=1 // pred_fallthru
      _
    // Predicated region
    $region10: #{tpu_custom_call.1} parent=1 // pred_check
      _
    $region11: #{tpu_custom_call.1} parent=1 // pred_check_branch
      %16 = sbr.rel (0) target = $region13
    $region12: #{tpu_custom_call.1} parent=1 // pred_region
      _
    $region13: #{tpu_custom_call.1} parent=1 // pred_fallthru
      _
    // Predicated region
    $region14: #{tpu_custom_call.1} parent=1 // pred_check
      _
    $region15: #{tpu_custom_call.1} parent=1 // pred_check_branch
      %18 = sbr.rel (0) target = $region17
    $region16: #{tpu_custom_call.1} parent=1 // pred_region
      _
    $region17: #{tpu_custom_call.1} parent=1 // pred_fallthru
      _
    // Predicated region
    $region18: #{tpu_custom_call.1} parent=1 // pred_check
      _
    $region19: #{tpu_custom_call.1} parent=1 // pred_check_branch
      %20 = sbr.rel (0) target = $region21
    $region20: #{tpu_custom_call.1} parent=1 // pred_region
      _
    $region21: #{tpu_custom_call.1} parent=1 // pred_fallthru
      _
    %v22 = vld [vmem:[%s0] sm:$0xf]
    %v23 = vld [vmem:[%s0 + $0x4] sm:$0xf]
    %v24 = vld [vmem:[%s0 + $0x8] sm:$0xf]
    %v25 = vld [vmem:[%s0 + $0xc] sm:$0xf]
    %v26 = vld [vmem:[%s2] sm:$0xf]
    %v27 = vld [vmem:[%s2 + $0x4] sm:$0xf]
    %v28 = vld [vmem:[%s2 + $0x8] sm:$0xf]
    %v29 = vld [vmem:[%s1] sm:$0xf]
    %v30 = vld [vmem:[%s1 + $0x4] sm:$0xf]
    %v31 = vld [vmem:[%s1 + $0x8] sm:$0xf]
    %v32 = vld [vmem:[%s1 + $0xc] sm:$0xf]
    %v33 = vld [vmem:[%s3] sm:$0xf]
    %v34 = vld [vmem:[%s3 + $0x4] sm:$0x1]
    %v39 = vunpack.c.l.b16 %v29
    %v40 = vunpack.c.l.b16 %v30
    %v41 = vunpack.c.l.b16 %v31
    %v42 = vunpack.c.l.b16 %v32
    %v43 = vpack.c.b16 %v40, %v39
    %v44 = vpack.c.b16 %v42, %v41
    %v47 = vunpack.c.l.b16 %v33
    %v48 = vunpack.c.l.b16 %v34
    %v49 = vpack.c.b16 %v48, %v47
    %vm50 = vcmask 80896
    %v52 = vsel %vm50, %v43, 0
    %v55 = vsel %vm50, %v44, 0
    %vm57 = vcmask 1044480
    %v59 = vsel %vm57, %v49, 0
    %61 = vmatprep.subr.bf16.mxu0 0
    %62 = vmatpush1.bf16.msra.mxu0 %v59
    %63 = vmatprep.subr.bf16.mxu0 0
    %64 = vmatpush1.bf16.msra.mxu0 0
    %65 = vmatprep.subr.bf16.mxu0 0
    %66 = vmatpush1.bf16.msra.mxu0 0
    %67 = vmatprep.subr.bf16.mxu0 0
    %68 = vmatpush1.bf16.msra.mxu0 0
    %69 = vmatprep.subr.bf16.mxu0 0
    %70 = vmatpush1.bf16.msra.mxu0 0
    %71 = vmatprep.subr.bf16.mxu0 0
    %72 = vmatpush1.bf16.msra.mxu0 0
    %73 = vmatprep.subr.bf16.mxu0 0
    %74 = vmatpush1.bf16.msra.mxu0 0
    %75 = vmatprep.subr.bf16.mxu0 0
    %76 = vmatpush1.bf16.msra.mxu0 0
    %77 = vmatprep.subr.bf16.mxu0 0
    %78 = vmatpush1.bf16.msra.mxu0 0
    %79 = vmatprep.subr.bf16.mxu0 0
    %80 = vmatpush1.bf16.msra.mxu0 0
    %81 = vmatprep.subr.bf16.mxu0 0
    %82 = vmatpush1.bf16.msra.mxu0 0
    %83 = vmatprep.subr.bf16.mxu0 0
    %84 = vmatpush1.bf16.msra.mxu0 0
    %85 = vmatprep.subr.bf16.mxu0 0
    %86 = vmatpush1.bf16.msra.mxu0 0
    %87 = vmatprep.subr.bf16.mxu0 0
    %88 = vmatpush1.bf16.msra.mxu0 0
    %89 = vmatprep.subr.bf16.mxu0 0
    %90 = vmatpush1.bf16.msra.mxu0 0
    %91 = vmatprep.subr.bf16.mxu0 0
    %92 = vmatpush1.bf16.msra.mxu0 0
    %93 = vmatprep.mubr.bf16.mxu0 0
    %94 = vmatmul.mubr.bf16.gmra.mrb[0].mxu0 %v52
    %v95 = vpop.f32.mrb[0].mxu0
    %v96 = vadd.f32 0.0, %v95
    %v97 = vpop.f32.mrb[0].mxu0
    %v98 = vpop.f32.mrb[0].mxu0
    %v99 = vadd.f32 0.0, %v98
    %v100 = vpop.f32.mrb[0].mxu0
    %101 = vmatprep.mubr.bf16.mxu0 0
    %102 = vmatmul.mubr.bf16.gmra.mrb[0].mxu0 %v55
    %v103 = vpop.f32.mrb[0].mxu0
    %v104 = vadd.f32 0.0, %v103
    %v105 = vpop.f32.mrb[0].mxu0
    %v106 = vpop.f32.mrb[0].mxu0
    %v107 = vadd.f32 0.0, %v106
    %v108 = vpop.f32.mrb[0].mxu0
    %109 = vdwg.mxu0
    %v114 = vunpack.c.l.b16 %v22
    %v115 = vunpack.c.l.b16 %v23
    %v116 = vunpack.c.l.b16 %v24
    %v117 = vunpack.c.l.b16 %v25
    %v118 = vpack.c.b16 %v115, %v114
    %v119 = vpack.c.b16 %v117, %v116
    %v123 = vunpack.c.l.b16 %v26
    %v124 = vunpack.c.l.b16 %v27
    %v125 = vunpack.c.l.b16 %v28
    %v126 = vpack.c.b16 %v124, %v123
    %v127 = vpack.c.b16 %v125, %v125
    %vm129 = vcmask 195584
    %v131 = vsel %vm129, %v118, 0
    %v134 = vsel %vm129, %v119, 0
    %vm136 = vcmask 1043456
    %v138 = vsel %vm136, %v127, 0
    %140 = vmatprep.subr.bf16.mxu0 0
    %141 = vmatpush1.bf16.msra.mxu0 %v126
    %142 = vmatprep.subr.bf16.mxu0 0
    %143 = vmatpush1.bf16.msra.mxu0 %v138
    %144 = vmatprep.subr.bf16.mxu0 0
    %145 = vmatpush1.bf16.msra.mxu0 0
    %146 = vmatprep.subr.bf16.mxu0 0
    %147 = vmatpush1.bf16.msra.mxu0 0
    %148 = vmatprep.subr.bf16.mxu0 0
    %149 = vmatpush1.bf16.msra.mxu0 0
    %150 = vmatprep.subr.bf16.mxu0 0
    %151 = vmatpush1.bf16.msra.mxu0 0
    %152 = vmatprep.subr.bf16.mxu0 0
    %153 = vmatpush1.bf16.msra.mxu0 0
    %154 = vmatprep.subr.bf16.mxu0 0
    %155 = vmatpush1.bf16.msra.mxu0 0
    %156 = vmatprep.subr.bf16.mxu0 0
    %157 = vmatpush1.bf16.msra.mxu0 0
    %158 = vmatprep.subr.bf16.mxu0 0
    %159 = vmatpush1.bf16.msra.mxu0 0
    %160 = vmatprep.subr.bf16.mxu0 0
    %161 = vmatpush1.bf16.msra.mxu0 0
    %162 = vmatprep.subr.bf16.mxu0 0
    %163 = vmatpush1.bf16.msra.mxu0 0
    %164 = vmatprep.subr.bf16.mxu0 0
    %165 = vmatpush1.bf16.msra.mxu0 0
    %166 = vmatprep.subr.bf16.mxu0 0
    %167 = vmatpush1.bf16.msra.mxu0 0
    %168 = vmatprep.subr.bf16.mxu0 0
    %169 = vmatpush1.bf16.msra.mxu0 0
    %170 = vmatprep.subr.bf16.mxu0 0
    %171 = vmatpush1.bf16.msra.mxu0 0
    %172 = vmatprep.mubr.bf16.mxu0 0
    %173 = vmatmul.mubr.bf16.gmra.mrb[0].mxu0 %v131
    %v174 = vpop.f32.mrb[0].mxu0
    %v175 = vadd.f32 %v96, %v174
    %v176 = vpop.f32.mrb[0].mxu0
    %v177 = vpop.f32.mrb[0].mxu0
    %v178 = vadd.f32 %v99, %v177
    %v179 = vpop.f32.mrb[0].mxu0
    %180 = vmatprep.mubr.bf16.mxu0 0
    %181 = vmatmul.mubr.bf16.gmra.mrb[0].mxu0 %v134
    %v182 = vpop.f32.mrb[0].mxu0
    %v183 = vadd.f32 %v104, %v182
    %v184 = vpop.f32.mrb[0].mxu0
    %v185 = vpop.f32.mrb[0].mxu0
    %v186 = vadd.f32 %v107, %v185
    %v187 = vpop.f32.mrb[0].mxu0
    %188 = vdwg.mxu0
    %v189 = vld [vmem:[%s4] sm:$0x1]
    %v191 = vlaneseq
    %v192 = vshrl.u32 %v191, 7
    %v193 = vsub.s32 0, %v192
    %v194 = vrot.slane %v189, %v193
    %v196 = vadd.f32 %v175, %v194
    %v197 = vadd.f32 %v178, %v194
    %v198 = vadd.f32 %v183, %v194
    %v199 = vadd.f32 %v186, %v194
    %200 = vst [vmem:[#allocation2] sm:$0xff] %v196
    %201 = vst [vmem:[#allocation2 + $0x8] sm:$0xff] %v197
    %202 = vst [vmem:[#allocation2 + $0x10] sm:$0xff] %v198
    %203 = vst [vmem:[#allocation2 + $0x18] sm:$0xff] %v199
    // Predicated region
    $region22: #{tpu_custom_call.1} parent=1 // pred_check
      _
    $region23: #{tpu_custom_call.1} parent=1 // pred_check_branch
      %205 = sbr.rel (0) target = $region25
    $region24: #{tpu_custom_call.1} parent=1 // pred_region
      %s207 = ssub.s32 512, 512
      %208 = vsyncadd [#allocation3], %s207
      %s209 = sshll.u32 [#allocation2], 4
      %s210 = int_to_ptr.vmem [resolvable:$true] %s209
      %215 = dma.vmem_to_hbm [thread:$0]  %s210, 512, %s5, [#allocation3], 128, 128, 8
    $region25: #{tpu_custom_call.1} parent=1 // pred_fallthru
      _
    // Predicated region
    $region26: #{tpu_custom_call.1} parent=1 // pred_check
      _
    $region27: #{tpu_custom_call.1} parent=1 // pred_check_branch
      %217 = sbr.rel (0) target = $region29
    $region28: #{tpu_custom_call.1} parent=1 // pred_region
      %218 = dma.done [#allocation3], 512
    $region29: #{tpu_custom_call.1} parent=1 // pred_fallthru
      _
    %219 = vsyncpa [#allocation3], 1

</llo_original>
